<compile_context>
chip_gen: v7x
topology: tpu7x:2x2x1
jax: 0.10.0
libtpu: 0.0.40
codegen_flags: <defaults>
</compile_context>

<pallas_src>
import functools

import jax
import jax.numpy as jnp
from jax.experimental import pallas as pl
from jax.experimental.pallas import tpu as pltpu


def _dice_partial_kernel(x_ref, t_ref, inter_ref, card_ref, *,
                         d_cols, tk, needs_mask):
    """Accumulate per-row sum(sigmoid(x)*t) and sum(sigmoid(x)+t).

    Grid: (row_blocks, col_tiles).  The output blocks map to the same block
    index for every column tile, so they stay resident in VMEM across the
    innermost ("arbitrary") axis and act as accumulators.
    """
    k = pl.program_id(1)

    @pl.when(k == 0)
    def _init():
        inter_ref[...] = jnp.zeros_like(inter_ref)
        card_ref[...] = jnp.zeros_like(card_ref)

    x = x_ref[...].astype(jnp.float32)
    t = t_ref[...].astype(jnp.float32)
    p = jax.nn.sigmoid(x)

    pt = p * t
    pc = p + t
    if needs_mask:
        # Mask the out-of-range columns of the ragged boundary tile instead
        # of padding the arrays in HBM.
        limit = d_cols - k * tk
        col = jax.lax.broadcasted_iota(jnp.int32, x.shape, dimension=1)
        valid = col < limit
        pt = jnp.where(valid, pt, 0.0)
        pc = jnp.where(valid, pc, 0.0)

    inter_ref[...] += jnp.sum(pt, axis=1, keepdims=True)
    card_ref[...] += jnp.sum(pc, axis=1, keepdims=True)


def _pick_row_factor(n, d):
    """Pick R dividing d so rows = n*R is a multiple of 8 (and >= 16 when
    possible, enabling >= 2 row blocks), while keeping d//R lane-dense."""
    best = None
    for r in range(1, min(d, 64) + 1):
        if d % r != 0:
            continue
        if r > 1 and d // r < 128:
            break
        rows = n * r
        if rows % 8 != 0:
            continue
        if best is None:
            best = r
        if rows >= 16:
            return r
    return best if best is not None else 1


def _choose_tiling(rows, d_cols, itemsize, budget):
    """Return (row_block, tk, num_col_tiles, needs_mask)."""
    # Row-block candidates: divisors of rows that are multiples of 8 (or the
    # full dim if rows is not 8-aligned).  Prefer >= 2 blocks for megacore.
    if rows % 8 != 0:
        candidates = [rows]
    else:
        candidates = [rb for rb in range(8, rows + 1, 8) if rows % rb == 0]
        multi = [rb for rb in candidates if rows // rb >= 2]
        if multi:
            candidates = multi

    # Case 1: a whole row fits the budget -> single full-width column tile
    # (full-dim block: no 128-divisibility requirement, no mask).  Take the
    # largest admissible row block to amortize per-grid-step overhead.
    for rb in sorted(candidates, reverse=True):
        if rb * d_cols * itemsize <= budget:
            return rb, d_cols, 1, False

    # Case 2: tile the columns with the smallest row block; 128-aligned tk.
    rb = min(candidates)
    tk = budget // (rb * itemsize)
    tk = max(128, (tk // 128) * 128)
    tk = min(tk, ((d_cols + 127) // 128) * 128)
    num_col = pl.cdiv(d_cols, tk)
    needs_mask = (d_cols % tk) != 0
    return rb, tk, num_col, needs_mask


def dice_loss(input_, target, class_masks=None, *, eps=1e-6):
    """Pallas implementation of DiceLoss.forward (class_masks is unused)."""
    del class_masks  # not used by the reference forward pass
    n, c, h, w = input_.shape
    d = c * h * w

    r = _pick_row_factor(n, d)
    rows = n * r
    d_cols = d // r

    # Contiguous row-major reshape: layout-only, no extra HBM pass, no cast.
    x = input_.reshape(rows, d_cols)
    t = target.reshape(rows, d_cols)

    # Per-input block budget: ~4 MiB, respecting the chip's VMEM capacity
    # (v5e/v6e 128 MiB, v7x 64 MiB) with headroom for double-buffering.
    try:
        vmem_bytes = int(pltpu.get_tpu_info().vmem_capacity_bytes)
    except Exception:
        vmem_bytes = 64 * 1024 * 1024
    block_budget = min(4 * 1024 * 1024, vmem_bytes // 32)
    itemsize = max(jnp.dtype(x.dtype).itemsize, jnp.dtype(t.dtype).itemsize)

    row_block, tk, num_col_tiles, needs_mask = _choose_tiling(
        rows, d_cols, itemsize, block_budget)
    num_row_blocks = rows // row_block
    grid = (num_row_blocks, num_col_tiles)

    inter, card = pl.pallas_call(
        functools.partial(_dice_partial_kernel,
                          d_cols=d_cols, tk=tk, needs_mask=needs_mask),
        out_shape=(
            jax.ShapeDtypeStruct((rows, 1), jnp.float32),
            jax.ShapeDtypeStruct((rows, 1), jnp.float32),
        ),
        grid_spec=pltpu.PrefetchScalarGridSpec(
            num_scalar_prefetch=0,
            grid=grid,
            in_specs=[
                pl.BlockSpec((row_block, tk), lambda rb, kb: (rb, kb)),
                pl.BlockSpec((row_block, tk), lambda rb, kb: (rb, kb)),
            ],
            out_specs=(
                pl.BlockSpec((row_block, 1), lambda rb, kb: (rb, 0)),
                pl.BlockSpec((row_block, 1), lambda rb, kb: (rb, 0)),
            ),
        ),
        compiler_params=pltpu.CompilerParams(
            dimension_semantics=("parallel", "arbitrary"),
            vmem_limit_bytes=int(min(64 * 1024 * 1024, vmem_bytes // 2)),
        ),
    )(x, t)

    # Tiny finalization in XLA: fold the R partial rows of each sample, then
    # dice score + mean over the batch.
    inter = inter.reshape(n, r).sum(axis=1)
    card = card.reshape(n, r).sum(axis=1)
    dice = 2.0 * inter / (card + eps)
    return jnp.mean(1.0 - dice)


def _reference_dice_loss(input_, target, eps=1e-6):
    p = jax.nn.sigmoid(input_.astype(jnp.float32))
    t = target.astype(jnp.float32)
    inter = jnp.sum(p * t, axis=(1, 2, 3))
    card = jnp.sum(p + t, axis=(1, 2, 3))
    dice = 2.0 * inter / (card + eps)
    return jnp.mean(1.0 - dice)


if __name__ == "__main__":
    key = jax.random.PRNGKey(0)
    k1, k2, k3 = jax.random.split(key, 3)

    N, C, H, W = 2, 4, 16, 16
    input_ = jax.random.normal(k1, (N, C, H, W), dtype=jnp.float32)
    target = (jax.random.uniform(k2, (N, C, H, W)) > 0.5).astype(jnp.float32)
    class_masks = (jax.random.uniform(k3, (N, C)) > 0.5).astype(jnp.float32)

    loss = jax.block_until_ready(dice_loss(input_, target, class_masks))
    ref = jax.block_until_ready(_reference_dice_loss(input_, target))

    assert jnp.allclose(loss, ref, rtol=1e-5, atol=1e-5), (loss, ref)
    print("KERNEL_OK")
</pallas_src>

<mosaic_0001>
module attributes {stable_mosaic.version = 11 : i64} {
  func.func @_dice_partial_kernel(%arg0: i32, %arg1: i32, %arg2: memref<8x128xf32, #tpu.memory_space<vmem>>, %arg3: memref<8x128xf32, #tpu.memory_space<vmem>>, %arg4: memref<8x1xf32, #tpu.memory_space<vmem>>, %arg5: memref<8x1xf32, #tpu.memory_space<vmem>>) attributes {dimension_semantics = [#tpu.dimension_semantics<parallel>, #tpu.dimension_semantics<arbitrary>], iteration_bounds = array<i64: 2, 1>, scalar_prefetch = 0 : i64, scratch_operands = 0 : i64, tpu.core_type = #tpu.core_type<tc>, window_params = [{transform_indices = @transform_0, window_bounds = array<i64: 8, 128>}, {transform_indices = @transform_1, window_bounds = array<i64: 8, 128>}, {transform_indices = @transform_2, window_bounds = array<i64: 8, 1>}, {transform_indices = @transform_3, window_bounds = array<i64: 8, 1>}]} {
    %c0_i32 = arith.constant 0 : i32
    %0 = arith.cmpi eq, %arg1, %c0_i32 : i32
    %1 = arith.extui %0 : i1 to i32
    %c0_i32_0 = arith.constant 0 : i32
    %2 = arith.cmpi ne, %1, %c0_i32_0 : i32
    scf.if %2 {
      %cst_14 = arith.constant 0.000000e+00 : f32
      %22 = vector.broadcast %cst_14 : f32 to vector<8x1xf32>
      %c0_15 = arith.constant 0 : index
      %c0_16 = arith.constant 0 : index
      %23 = vector.load %arg4[%c0_15, %c0_16] : memref<8x1xf32, #tpu.memory_space<vmem>>, vector<8x1xf32>
      tpu.vector_store %arg4[%c0_15, %c0_16], %22 {strides = array<i32>} : memref<8x1xf32, #tpu.memory_space<vmem>>, vector<8x1xf32>,
      %cst_17 = arith.constant 0.000000e+00 : f32
      %24 = vector.broadcast %cst_17 : f32 to vector<8x1xf32>
      %c0_18 = arith.constant 0 : index
      %c0_19 = arith.constant 0 : index
      %25 = vector.load %arg5[%c0_18, %c0_19] : memref<8x1xf32, #tpu.memory_space<vmem>>, vector<8x1xf32>
      tpu.vector_store %arg5[%c0_18, %c0_19], %24 {strides = array<i32>} : memref<8x1xf32, #tpu.memory_space<vmem>>, vector<8x1xf32>,
    } else {
    }
    %c0 = arith.constant 0 : index
    %c0_1 = arith.constant 0 : index
    %3 = vector.load %arg2[%c0, %c0_1] : memref<8x128xf32, #tpu.memory_space<vmem>>, vector<8x128xf32>
    %c0_2 = arith.constant 0 : index
    %c0_3 = arith.constant 0 : index
    %4 = vector.load %arg3[%c0_2, %c0_3] : memref<8x128xf32, #tpu.memory_space<vmem>>, vector<8x128xf32>
    %5 = arith.negf %3 : vector<8x128xf32>
    %6 = math.exp %5 : vector<8x128xf32>
    %cst = arith.constant 1.000000e+00 : f32
    %7 = vector.broadcast %cst : f32 to vector<8x128xf32>
    %8 = arith.addf %7, %6 : vector<8x128xf32>
    %9 = arith.divf %7, %8 : vector<8x128xf32>
    %10 = arith.mulf %9, %4 : vector<8x128xf32>
    %11 = arith.addf %9, %4 : vector<8x128xf32>
    %c0_4 = arith.constant 0 : index
    %c0_5 = arith.constant 0 : index
    %12 = vector.load %arg4[%c0_4, %c0_5] : memref<8x1xf32, #tpu.memory_space<vmem>>, vector<8x1xf32>
    %cst_6 = arith.constant dense<0.000000e+00> : vector<8xf32>
    %13 = vector.multi_reduction <add>, %10, %cst_6 [1] : vector<8x128xf32> to vector<8xf32>
    %14 = vector.shape_cast %13 : vector<8xf32> to vector<8x1xf32>
    %15 = arith.addf %12, %14 : vector<8x1xf32>
    %c0_7 = arith.constant 0 : index
    %c0_8 = arith.constant 0 : index
    %16 = vector.load %arg4[%c0_7, %c0_8] : memref<8x1xf32, #tpu.memory_space<vmem>>, vector<8x1xf32>
    tpu.vector_store %arg4[%c0_7, %c0_8], %15 {strides = array<i32>} : memref<8x1xf32, #tpu.memory_space<vmem>>, vector<8x1xf32>,
    %c0_9 = arith.constant 0 : index
    %c0_10 = arith.constant 0 : index
    %17 = vector.load %arg5[%c0_9, %c0_10] : memref<8x1xf32, #tpu.memory_space<vmem>>, vector<8x1xf32>
    %cst_11 = arith.constant dense<0.000000e+00> : vector<8xf32>
    %18 = vector.multi_reduction <add>, %11, %cst_11 [1] : vector<8x128xf32> to vector<8xf32>
    %19 = vector.shape_cast %18 : vector<8xf32> to vector<8x1xf32>
    %20 = arith.addf %17, %19 : vector<8x1xf32>
    %c0_12 = arith.constant 0 : index
    %c0_13 = arith.constant 0 : index
    %21 = vector.load %arg5[%c0_12, %c0_13] : memref<8x1xf32, #tpu.memory_space<vmem>>, vector<8x1xf32>
    tpu.vector_store %arg5[%c0_12, %c0_13], %20 {strides = array<i32>} : memref<8x1xf32, #tpu.memory_space<vmem>>, vector<8x1xf32>,
    return
  }
  func.func @transform_0(%arg0: i32, %arg1: i32) -> (i32, i32) {
    %c0_i32 = arith.constant 0 : i32
    return %arg0, %arg1 : i32, i32
  }
  func.func @transform_1(%arg0: i32, %arg1: i32) -> (i32, i32) {
    %c0_i32 = arith.constant 0 : i32
    return %arg0, %arg1 : i32, i32
  }
  func.func @transform_2(%arg0: i32, %arg1: i32) -> (i32, i32) {
    %c0_i32 = arith.constant 0 : i32
    %c0_i32_0 = arith.constant 0 : i32
    return %arg0, %c0_i32 : i32, i32
  }
  func.func @transform_3(%arg0: i32, %arg1: i32) -> (i32, i32) {
    %c0_i32 = arith.constant 0 : i32
    %c0_i32_0 = arith.constant 0 : i32
    return %arg0, %c0_i32 : i32, i32
  }
}

</mosaic_0001>

<llo_original>
// kernel: tpu_custom_call.1
$region0: #{tpu_custom_call.1}
  #allocation0 [shape = 'u32[]', space=smem, size = 0x4, offset = 0x4, fixed_abs, tag = 'smem constant byte address 0x4 - core index']
  #allocation1 [shape = 'u32[144,128]{1,0:T(1,128)}', space=vmem, size = 0x12000, scoped, tag = 'internal scratch']
  %s0 = inlined_call_operand.hbm [shape: f32[16,128], index: 0, kind: input, shape index: {}]
  %s1 = inlined_call_operand.hbm [shape: f32[16,128], index: 1, kind: input, shape index: {}]
  %s2 = inlined_call_operand.vmem [shape: f32[16,1], index: 2, kind: output, shape index: {0}]
  %s3 = inlined_call_operand.vmem [shape: f32[16,1], index: 3, kind: output, shape index: {1}]
  %4 = xla_tuple %s2, %s3
  %s5 = sld [smem:[#allocation0]]
  $region61: #{tpu_custom_call.1} parent=0
    _
  %s7 = ssub.s32 1, %s5
  %s8 = scalar_select 0, %s7, %s5
  $region1: #{tpu_custom_call.1} parent=0
    #allocation2 [shape = 'u8[8192]{0}', space=vmem, size = 0x2000, scoped, tag = 'input window, operand 0']
    #allocation3 [shape = 's32[2]{0}', space=sflag, size = 0x8, scoped, tag = 'scoped memory for tpu_custom_call.1']
    #allocation4 [shape = 'u8[8192]{0}', space=vmem, size = 0x2000, scoped, tag = 'input window, operand 1']
    #allocation5 [shape = 's32[2]{0}', space=sflag, size = 0x8, scoped, tag = 'scoped memory for tpu_custom_call.1']
    %9 = vsyncpa [#allocation3], 0
    %s10 = scalar_lea.sflag [#allocation3], 1
    %11 = vsyncpa %s10, 0
    %12 = vsyncpa [#allocation5], 0
    %s13 = scalar_lea.sflag [#allocation5], 1
    %14 = vsyncpa %s13, 0
    loop: start=0, step=1, limit=4
    $region2: #{tpu_custom_call.1} parent=1 // loop_pre_header
      _
    $region3: #{tpu_custom_call.1} parent=1 // loop_header
      %s16 = sphi 0, %s20
      %p17 = scmp.ge.s32.totalorder %s16, 4
      %s23 = sphi 0, %s35
      %s24 = sphi 0, %s31
      %s25 = sphi 0, %s23
      %s26 = sphi 0, %s24
      %s27 = sphi 0, %s25
      %s28 = sphi 0, %s26
      %s40 = sphi 0, %s42
      %s43 = sphi 0, %s40
      %s44 = sphi 0, %s43
      %s60 = sphi 0, %s44
      %s68 = sphi 0, %s70
      %s71 = sphi 0, %s68
      %s72 = sphi 0, %s71
      %s88 = sphi 0, %s72
      %s94 = sphi 0, %s96
      %s97 = sphi 0, %s94
      %s98 = sphi 0, %s97
      %s114 = sphi 0, %s98
      %s120 = sphi 0, %s122
      %s123 = sphi 0, %s120
      %s124 = sphi 0, %s123
      %s140 = sphi 0, %s124
    $region4: #{tpu_custom_call.1} parent=1 // loop_header_branch
      %19 = sbr.rel (%p17) target = $region8
    $region5: #{tpu_custom_call.1} parent=1 // loop_body
      %s21 = ssub.s32 %s16, 1
      %s22 = ssub.s32 %s16, 2
      %s29 = sadd.s32 1, %s24
      %p30 = scmp.ge.s32.totalorder %s29, 1
      %s31 = scalar_select %p30, 0, %s29
      %s32 = sadd.s32 1, %s23
      %s33 = scalar_select %p30, %s32, %s23
      %p34 = scmp.ge.s32.totalorder %s33, 2
      %s35 = scalar_select %p34, 0, %s33
      %s36 = ssub.s32 %s23, %s35
      %s37 = ssub.s32 %s24, %s31
      %s38 = sor.u32 %s36, %s37
      %p39 = scmp.eq.s32.totalorder %s38, 0
      %s41 = sadd.s32 %s40, 1
      %s42 = scalar_select %p39, %s40, %s41
      %p45 = pneg %p39
      %p46 = scmp.eq.s32.totalorder %s16, 1
      %p47 = por %p45, %p46
      %p48 = scmp.ne.s32.totalorder %s40, %s43
      %p49 = scmp.eq.s32.totalorder %s16, 0
      %p50 = por %p48, %p49
      %p51 = scmp.ne.s32.totalorder %s40, %s43
      %p52 = scmp.eq.s32.totalorder %s21, 1
      %p53 = por %p51, %p52
      %p54 = scmp.ne.s32.totalorder %s43, %s44
      %p55 = scmp.eq.s32.totalorder %s21, 0
      %p56 = por %p54, %p55
      %p57 = scmp.ne.s32.totalorder %s43, %s44
      %p58 = scmp.eq.s32.totalorder %s22, 1
      %p59 = por %p57, %p58
      %p61 = scmp.ne.s32.totalorder %s44, %s60
      %p62 = scmp.eq.s32.totalorder %s22, 0
      %p63 = por %p61, %p62
      %s64 = ssub.s32 %s23, %s35
      %s65 = ssub.s32 %s24, %s31
      %s66 = sor.u32 %s64, %s65
      %p67 = scmp.eq.s32.totalorder %s66, 0
      %s69 = sadd.s32 %s68, 1
      %s70 = scalar_select %p67, %s68, %s69
      %p73 = pneg %p67
      %p74 = scmp.eq.s32.totalorder %s16, 1
      %p75 = por %p73, %p74
      %p76 = scmp.ne.s32.totalorder %s68, %s71
      %p77 = scmp.eq.s32.totalorder %s16, 0
      %p78 = por %p76, %p77
      %p79 = scmp.ne.s32.totalorder %s68, %s71
      %p80 = scmp.eq.s32.totalorder %s21, 1
      %p81 = por %p79, %p80
      %p82 = scmp.ne.s32.totalorder %s71, %s72
      %p83 = scmp.eq.s32.totalorder %s21, 0
      %p84 = por %p82, %p83
      %p85 = scmp.ne.s32.totalorder %s71, %s72
      %p86 = scmp.eq.s32.totalorder %s22, 1
      %p87 = por %p85, %p86
      %p89 = scmp.ne.s32.totalorder %s72, %s88
      %p90 = scmp.eq.s32.totalorder %s22, 0
      %p91 = por %p89, %p90
      %s92 = ssub.s32 %s23, %s35
      %p93 = scmp.eq.s32.totalorder %s92, 0
      %s95 = sadd.s32 %s94, 1
      %s96 = scalar_select %p93, %s94, %s95
      %p99 = pneg %p93
      %p100 = scmp.eq.s32.totalorder %s16, 1
      %p101 = por %p99, %p100
      %p102 = scmp.ne.s32.totalorder %s94, %s97
      %p103 = scmp.eq.s32.totalorder %s16, 0
      %p104 = por %p102, %p103
      %p105 = scmp.ne.s32.totalorder %s94, %s97
      %p106 = scmp.eq.s32.totalorder %s21, 1
      %p107 = por %p105, %p106
      %p108 = scmp.ne.s32.totalorder %s97, %s98
      %p109 = scmp.eq.s32.totalorder %s21, 0
      %p110 = por %p108, %p109
      %p111 = scmp.ne.s32.totalorder %s97, %s98
      %p112 = scmp.eq.s32.totalorder %s22, 1
      %p113 = por %p111, %p112
      %p115 = scmp.ne.s32.totalorder %s98, %s114
      %p116 = scmp.eq.s32.totalorder %s22, 0
      %p117 = por %p115, %p116
      %s118 = ssub.s32 %s23, %s35
      %p119 = scmp.eq.s32.totalorder %s118, 0
      %s121 = sadd.s32 %s120, 1
      %s122 = scalar_select %p119, %s120, %s121
      %p125 = pneg %p119
      %p126 = scmp.eq.s32.totalorder %s16, 1
      %p127 = por %p125, %p126
      %p128 = scmp.ne.s32.totalorder %s120, %s123
      %p129 = scmp.eq.s32.totalorder %s16, 0
      %p130 = por %p128, %p129
      %p131 = scmp.ne.s32.totalorder %s120, %s123
      %p132 = scmp.eq.s32.totalorder %s21, 1
      %p133 = por %p131, %p132
      %p134 = scmp.ne.s32.totalorder %s123, %s124
      %p135 = scmp.eq.s32.totalorder %s21, 0
      %p136 = por %p134, %p135
      %p137 = scmp.ne.s32.totalorder %s123, %s124
      %p138 = scmp.eq.s32.totalorder %s22, 1
      %p139 = por %p137, %p138
      %p141 = scmp.ne.s32.totalorder %s124, %s140
      %p142 = scmp.eq.s32.totalorder %s22, 0
      %p143 = por %p141, %p142
      %p144 = scmp.le.s32.totalorder 1, %s16
      %p145 = scmp.lt.s32.totalorder %s16, 3
      %p146 = pnand %p144, %p145
      %p147 = pneg %p146
      // Predicated region
      $region9: #{tpu_custom_call.1} parent=5 // pred_check
        _
      $region10: #{tpu_custom_call.1} parent=5 // pred_check_branch
        %149 = sbr.rel (%p146) target = $region12
      $region11: #{tpu_custom_call.1} parent=5 // pred_region
        %s150 = ssub.s32 %s16, 1
      $region12: #{tpu_custom_call.1} parent=5 // pred_fallthru
        _
      %p151 = scmp.lt.s32.totalorder %s16, 2
      // Predicated region
      $region13: #{tpu_custom_call.1} parent=5 // pred_check
        %p152 = pneg %p151
      $region14: #{tpu_custom_call.1} parent=5 // pred_check_branch
        %154 = sbr.rel (%p152) target = $region16
      $region15: #{tpu_custom_call.1} parent=5 // pred_region
        // Predicated region
        $region17: #{tpu_custom_call.1} parent=15 // pred_check
          %p155 = pneg %p50
        $region18: #{tpu_custom_call.1} parent=15 // pred_check_branch
          %157 = sbr.rel (%p155) target = $region20
        $region19: #{tpu_custom_call.1} parent=15 // pred_region
          %s158 = sand.u32 %s40, 1
          %s159 = scalar_lea.sflag [#allocation3], %s158
          %s160 = sand.u32 %s40, 1
          %s161 = smul.addr %s160, 8
          %s162 = scalar_lea.vmem [#allocation2], %s161
          %s164 = ssub.s32 128, 128
          %165 = vsyncadd %s159, %s164
          %s166 = sadd.s32 %s24, %s23
          %s167 = smul.addr %s166, 128
          %s168 = scalar_lea.hbm %s0, %s167
          %s170 = sshll.u32 %s162, 4
          %s171 = int_to_ptr.vmem [resolvable:$true] %s170
          %173 = dma.hbm_to_vmem [thread:$0]  %s168, 128, %s171, %s159
        $region20: #{tpu_custom_call.1} parent=15 // pred_fallthru
          _
        // Predicated region
        $region21: #{tpu_custom_call.1} parent=15 // pred_check
          %p174 = pneg %p78
        $region22: #{tpu_custom_call.1} parent=15 // pred_check_branch
          %176 = sbr.rel (%p174) target = $region24
        $region23: #{tpu_custom_call.1} parent=15 // pred_region
          %s177 = sand.u32 %s68, 1
          %s178 = scalar_lea.sflag [#allocation5], %s177
          %s179 = sand.u32 %s68, 1
          %s180 = smul.addr %s179, 8
          %s181 = scalar_lea.vmem [#allocation4], %s180
          %s183 = ssub.s32 128, 128
          %184 = vsyncadd %s178, %s183
          %s185 = sadd.s32 %s24, %s23
          %s186 = smul.addr %s185, 128
          %s187 = scalar_lea.hbm %s1, %s186
          %s189 = sshll.u32 %s181, 4
          %s190 = int_to_ptr.vmem [resolvable:$true] %s189
          %192 = dma.hbm_to_vmem [thread:$0]  %s187, 128, %s190, %s178
        $region24: #{tpu_custom_call.1} parent=15 // pred_fallthru
          _
      $region16: #{tpu_custom_call.1} parent=5 // pred_fallthru
        _
      %p193 = scmp.le.s32.totalorder 1, %s16
      %p194 = scmp.lt.s32.totalorder %s16, 3
      %p195 = pnand %p193, %p194
      %p196 = pneg %p195
      // Predicated region
      $region25: #{tpu_custom_call.1} parent=5 // pred_check
        _
      $region26: #{tpu_custom_call.1} parent=5 // pred_check_branch
        %198 = sbr.rel (%p195) target = $region28
      $region27: #{tpu_custom_call.1} parent=5 // pred_region
        %s199 = ssub.s32 %s16, 1
        %s200 = sand.u32 %s43, 1
        %s201 = scalar_lea.sflag [#allocation3], %s200
        %s202 = sand.u32 %s43, 1
        %s203 = smul.addr %s202, 8
        %s204 = scalar_lea.vmem [#allocation2], %s203
        // Predicated region
        $region29: #{tpu_custom_call.1} parent=27 // pred_check
          %p205 = pneg %p56
        $region30: #{tpu_custom_call.1} parent=27 // pred_check_branch
          %207 = sbr.rel (%p205) target = $region32
        $region31: #{tpu_custom_call.1} parent=27 // pred_region
          %208 = dma.done %s201, 128
        $region32: #{tpu_custom_call.1} parent=27 // pred_fallthru
          _
        %s209 = sand.u32 %s71, 1
        %s210 = scalar_lea.sflag [#allocation5], %s209
        %s211 = sand.u32 %s71, 1
        %s212 = smul.addr %s211, 8
        %s213 = scalar_lea.vmem [#allocation4], %s212
        // Predicated region
        $region33: #{tpu_custom_call.1} parent=27 // pred_check
          %p214 = pneg %p84
        $region34: #{tpu_custom_call.1} parent=27 // pred_check_branch
          %216 = sbr.rel (%p214) target = $region36
        $region35: #{tpu_custom_call.1} parent=27 // pred_region
          %217 = dma.done %s210, 128
        $region36: #{tpu_custom_call.1} parent=27 // pred_fallthru
          _
        %s218 = sand.u32 %s43, 1
        %s219 = scalar_lea.sflag [#allocation3], %s218
        %s220 = sand.u32 %s43, 1
        %s221 = smul.addr %s220, 8
        %s222 = scalar_lea.vmem [#allocation2], %s221
        %p223 = pneg %p56
        %p224 = pneg %p53
        %s225 = sand.u32 %s71, 1
        %s226 = scalar_lea.sflag [#allocation5], %s225
        %s227 = sand.u32 %s71, 1
        %s228 = smul.addr %s227, 8
        %s229 = scalar_lea.vmem [#allocation4], %s228
        %p230 = pneg %p84
        %p231 = pneg %p81
        %p232 = pneg %p110
        %p233 = pneg %p107
        %p234 = scmp.lt.s32.totalorder %s25, 1
        %s235 = scalar_select %p234, %s25, 1
        %s236 = smul.addr %s235, 8
        %s237 = scalar_lea.vmem %s2, %s236
        %p238 = pneg %p136
        %p239 = pneg %p133
        %p240 = scmp.lt.s32.totalorder %s25, 1
        %s241 = scalar_select %p240, %s25, 1
        %s242 = smul.addr %s241, 8
        %s243 = scalar_lea.vmem %s3, %s242
        %p244 = scmp.lt.s32.totalorder %s25, 1
        %s245 = scalar_select %p244, %s25, 1
        %s246 = smul.addr %s245, 8
        %s247 = scalar_lea.vmem %s2, %s246
        %p248 = scmp.lt.s32.totalorder %s25, 1
        %s249 = scalar_select %p248, %s25, 1
        %s250 = smul.addr %s249, 8
        %s251 = scalar_lea.vmem %s3, %s250
        %p252 = scmp.eq.s32.totalorder %s26, 0
        // Predicated region
        $region37: #{tpu_custom_call.1} parent=27 // pred_check
          %p253 = pneg %p252
        $region38: #{tpu_custom_call.1} parent=27 // pred_check_branch
          %255 = sbr.rel (%p253) target = $region40
        $region39: #{tpu_custom_call.1} parent=27 // pred_region
          %vm256 = vcmask 7168
          %257 = vst.msk [vmem:[%s247] sm:$0xff] %vm256, 0.0
          %258 = vst.msk [vmem:[%s251] sm:$0xff] %vm256, 0.0
        $region40: #{tpu_custom_call.1} parent=27 // pred_fallthru
          _
        %v259 = vld [vmem:[%s204] sm:$0xff]
        %v260 = vld [vmem:[%s213] sm:$0xff]
        %v261 = vxor.u32 %v259, 2147483648
        %v262 = vmul.f32 %v261, 1.442695
        %v263 = vpow.pop %v262
        %v264 = vadd.f32 %v263, 1.0
        %v265 = vrcp.pop %v264
        %v266 = vmul.f32 1.0, %v265
        %v267 = vmul.f32 %v266, %v260
        %v268 = vadd.f32 %v266, %v260
        %v269 = vld [vmem:[%s247] sm:$0xff]
        %270 = vadd.xlane.f32.xlu0 %v267
        %v271 = vpop.xlane.xlu0 %270
        %v272 = vadd.f32 %v269, %v271
        %vm273 = vcmask 7168
        %274 = vst.msk [vmem:[%s247] sm:$0xff] %vm273, %v272
        %v275 = vld [vmem:[%s251] sm:$0xff]
        %276 = vadd.xlane.f32.xlu0 %v268
        %v277 = vpop.xlane.xlu0 %276
        %v278 = vadd.f32 %v275, %v277
        %279 = vst.msk [vmem:[%s251] sm:$0xff] %vm273, %v278
        %p280 = scmp.lt.s32.totalorder %s25, 1
        %s281 = scalar_select %p280, %s25, 1
        %s282 = smul.addr %s281, 8
        %s283 = scalar_lea.vmem %s2, %s282
        %p284 = scmp.lt.s32.totalorder %s25, 1
        %s285 = scalar_select %p284, %s25, 1
        %s286 = smul.addr %s285, 8
        %s287 = scalar_lea.vmem %s3, %s286
        // Predicated region
        $region41: #{tpu_custom_call.1} parent=27 // pred_check
          %p288 = pneg %p107
        $region42: #{tpu_custom_call.1} parent=27 // pred_check_branch
          %290 = sbr.rel (%p288) target = $region44
        $region43: #{tpu_custom_call.1} parent=27 // pred_region
          _
        $region44: #{tpu_custom_call.1} parent=27 // pred_fallthru
          _
        // Predicated region
        $region45: #{tpu_custom_call.1} parent=27 // pred_check
          %p291 = pneg %p133
        $region46: #{tpu_custom_call.1} parent=27 // pred_check_branch
          %293 = sbr.rel (%p291) target = $region48
        $region47: #{tpu_custom_call.1} parent=27 // pred_region
          _
        $region48: #{tpu_custom_call.1} parent=27 // pred_fallthru
          _
      $region28: #{tpu_custom_call.1} parent=5 // pred_fallthru
        _
      %p294 = scmp.le.s32.totalorder 2, %s16
      // Predicated region
      $region49: #{tpu_custom_call.1} parent=5 // pred_check
        %p295 = pneg %p294
      $region50: #{tpu_custom_call.1} parent=5 // pred_check_branch
        %297 = sbr.rel (%p295) target = $region52
      $region51: #{tpu_custom_call.1} parent=5 // pred_region
        %s298 = ssub.s32 %s16, 2
        // Predicated region
        $region53: #{tpu_custom_call.1} parent=51 // pred_check
          %p299 = pneg %p113
        $region54: #{tpu_custom_call.1} parent=51 // pred_check_branch
          %301 = sbr.rel (%p299) target = $region56
        $region55: #{tpu_custom_call.1} parent=51 // pred_region
          %p302 = scmp.lt.s32.totalorder %s27, 1
          %s303 = scalar_select %p302, %s27, 1
          %s304 = smul.addr %s303, 8
          %s305 = scalar_lea.vmem %s2, %s304
        $region56: #{tpu_custom_call.1} parent=51 // pred_fallthru
          _
        // Predicated region
        $region57: #{tpu_custom_call.1} parent=51 // pred_check
          %p306 = pneg %p139
        $region58: #{tpu_custom_call.1} parent=51 // pred_check_branch
          %308 = sbr.rel (%p306) target = $region60
        $region59: #{tpu_custom_call.1} parent=51 // pred_region
          %p309 = scmp.lt.s32.totalorder %s27, 1
          %s310 = scalar_select %p309, %s27, 1
          %s311 = smul.addr %s310, 8
          %s312 = scalar_lea.vmem %s3, %s311
        $region60: #{tpu_custom_call.1} parent=51 // pred_fallthru
          _
      $region52: #{tpu_custom_call.1} parent=5 // pred_fallthru
        _
    $region6: #{tpu_custom_call.1} parent=1 // loop_footer
      %s20 = sadd.s32 1, %s16
    $region7: #{tpu_custom_call.1} parent=1 // loop_footer_branch
      %15 = sbr.rel target = $region3
    $region8: #{tpu_custom_call.1} parent=1 // loop_exit
      _
    %313 = vsyncpa [#allocation3], 1
    %s314 = scalar_lea.sflag [#allocation3], 1
    %315 = vsyncpa %s314, 1
    %316 = vsyncpa [#allocation5], 1
    %s317 = scalar_lea.sflag [#allocation5], 1
    %318 = vsyncpa %s317, 1

</llo_original>
